<compile_context>
chip_gen: v6e
topology: v6e:2x2x1
jax: 0.10.0
libtpu: 0.0.40
codegen_flags: <defaults>
</compile_context>

<pallas_src>
import jax
import jax.numpy as jnp
from jax.experimental import pallas as pl
from jax.experimental.pallas import tpu as pltpu


# ---------------------------------------------------------------------------
# Tiling helpers
# ---------------------------------------------------------------------------
def _round_up(n: int, m: int) -> int:
    return pl.cdiv(n, m) * m


def _sublane(dtype) -> int:
    # Native sublane rows per tile: 8 for 4-byte, 16 for 2-byte, 32 for 1-byte.
    return 32 // jnp.dtype(dtype).itemsize


def _tile(dim: int, want: int, align: int) -> int:
    """Pick a block size: full dim if it fits in one block (always legal),
    otherwise the largest `align`-multiple <= want (boundary tile masked)."""
    if dim <= want:
        return dim
    return max((want // align) * align, align)


def _pick_tk(K: int, want: int, lane: int = 128) -> int:
    """Reduction-axis tile: must evenly divide K (no masking of the K axis,
    since garbage would be accumulated) and be lane-aligned, else full K."""
    if K <= want:
        return K
    t = (want // lane) * lane
    while t >= lane:
        if K % t == 0:
            return t
        t -= lane
    return K


# ---------------------------------------------------------------------------
# Fused classifier (Linear) + scaler:  out = (x @ w + b) * scale + mean
# ---------------------------------------------------------------------------
def _dense_scaler_kernel(x_ref, w_ref, b_ref, s_ref, m_ref, o_ref, acc_ref):
    k = pl.program_id(2)

    @pl.when(k == 0)
    def _():
        acc_ref[...] = jnp.zeros_like(acc_ref)

    acc_ref[...] += jnp.dot(x_ref[...], w_ref[...],
                            preferred_element_type=jnp.float32)

    @pl.when(k == pl.num_programs(2) - 1)
    def _():
        # Scaler epilogue fused into the matmul's single output store.
        o_ref[...] = ((acc_ref[...] + b_ref[...]) * s_ref[...]
                      + m_ref[...]).astype(o_ref.dtype)


def dense_with_scaler(x, w, b, scale, mean, *,
                      tile_m=256, tile_n=256, tile_k=512):
    """x: (M, K); w: (K, N); b, scale, mean: (N,) -> (M, N)."""
    M, K = x.shape
    K2, N = w.shape
    assert K == K2, (K, K2)

    sub = _sublane(x.dtype)
    tm = _tile(M, tile_m, sub)
    tn = _tile(N, tile_n, 128)
    tk = _pick_tk(K, tile_k)

    gm, gn, gk = pl.cdiv(M, tm), pl.cdiv(N, tn), K // tk

    itemsize = jnp.dtype(x.dtype).itemsize
    cost = pl.CostEstimate(
        flops=2 * M * N * K + 3 * M * N,
        transcendentals=0,
        bytes_accessed=itemsize * (M * K + K * N + M * N + 3 * N),
    )

    return pl.pallas_call(
        _dense_scaler_kernel,
        out_shape=jax.ShapeDtypeStruct((M, N), x.dtype),
        grid=(gm, gn, gk),
        in_specs=[
            pl.BlockSpec((tm, tk), lambda i, j, k: (i, k)),
            pl.BlockSpec((tk, tn), lambda i, j, k: (k, j)),
            pl.BlockSpec((1, tn), lambda i, j, k: (0, j)),
            pl.BlockSpec((1, tn), lambda i, j, k: (0, j)),
            pl.BlockSpec((1, tn), lambda i, j, k: (0, j)),
        ],
        out_specs=pl.BlockSpec((tm, tn), lambda i, j, k: (i, j)),
        scratch_shapes=[pltpu.VMEM((tm, tn), jnp.float32)],
        compiler_params=pltpu.CompilerParams(
            dimension_semantics=("parallel", "parallel", "arbitrary")),
        cost_estimate=cost,
    )(x, w, b.reshape(1, N), scale.reshape(1, N), mean.reshape(1, N))


# ---------------------------------------------------------------------------
# Standalone scaler layer:  out = x * scale + mean
# (kept for classifiers that are not a plain Linear)
# ---------------------------------------------------------------------------
def _scaler_kernel(x_ref, scale_ref, mean_ref, o_ref):
    # One fused expression: single load of x, single store of out per tile.
    o_ref[...] = x_ref[...] * scale_ref[...] + mean_ref[...]


def scaler_inverse_transform(x, scale, mean, *, tile_batch=1024, tile_feat=512):
    """x: (B, F); scale, mean: (F,)  ->  (B, F) = x * scale + mean."""
    B, F = x.shape
    sub = _sublane(x.dtype)

    tb = _tile(B, tile_batch, sub)
    tf = _tile(F, tile_feat, 128)
    gb, gf = pl.cdiv(B, tb), pl.cdiv(F, tf)

    # v7x megacore: make sure at least one "parallel" axis has >= 2 steps.
    if gb == 1 and gf == 1 and B >= 2 * sub:
        tb = _round_up(pl.cdiv(B, 2), sub)
        gb = pl.cdiv(B, tb)

    itemsize = jnp.dtype(x.dtype).itemsize
    cost = pl.CostEstimate(
        flops=2 * B * F,
        transcendentals=0,
        bytes_accessed=2 * B * F * itemsize + 2 * F * itemsize,
    )

    # Grid: feature tiles outer, batch tiles inner -> scale/mean block index
    # stays constant across consecutive steps (Pallas skips re-DMAing them).
    return pl.pallas_call(
        _scaler_kernel,
        out_shape=jax.ShapeDtypeStruct((B, F), x.dtype),
        grid=(gf, gb),
        in_specs=[
            pl.BlockSpec((tb, tf), lambda j, i: (i, j)),
            pl.BlockSpec((1, tf), lambda j, i: (0, j)),
            pl.BlockSpec((1, tf), lambda j, i: (0, j)),
        ],
        out_specs=pl.BlockSpec((tb, tf), lambda j, i: (i, j)),
        compiler_params=pltpu.CompilerParams(
            dimension_semantics=("parallel", "parallel")),
        cost_estimate=cost,
    )(x, scale.reshape(1, F), mean.reshape(1, F))


# ---------------------------------------------------------------------------
# Full module forward.  The encoder / classifier are user-injected nn.Modules
# with no fixed architecture in the spec; a tiny dense stand-in (plain XLA)
# is used for the encoder, while the classifier (Linear) + scaler are lowered
# to a single fused Pallas matmul-with-epilogue kernel.
# TODO(synk): lower the concrete encoder architecture to Pallas once it is
#             specified; only the scaler_layer op is fixed by the module.
# ---------------------------------------------------------------------------
def classifier_with_scaler_forward(x, params):
    latent = jax.nn.relu(x @ params["enc_w"] + params["enc_b"])
    return dense_with_scaler(latent, params["cls_w"], params["cls_b"],
                             params["scale"], params["mean"])


if __name__ == "__main__":
    key = jax.random.PRNGKey(0)
    ks = jax.random.split(key, 8)

    batch, in_features, latent_dim, n_props = 16, 32, 64, 32

    x = jax.random.normal(ks[0], (batch, in_features), dtype=jnp.float32)
    params = {
        "enc_w": jax.random.normal(ks[1], (in_features, latent_dim), jnp.float32) * 0.1,
        "enc_b": jax.random.normal(ks[2], (latent_dim,), jnp.float32) * 0.1,
        "cls_w": jax.random.normal(ks[3], (latent_dim, n_props), jnp.float32) * 0.1,
        "cls_b": jax.random.normal(ks[4], (n_props,), jnp.float32) * 0.1,
        "scale": jax.random.uniform(ks[5], (n_props,), jnp.float32,
                                    minval=0.5, maxval=2.0),
        "mean": jax.random.normal(ks[6], (n_props,), jnp.float32),
    }

    out = jax.block_until_ready(classifier_with_scaler_forward(x, params))

    # Pure-JAX reference (same broadcast semantics as the PyTorch module).
    latent_ref = jax.nn.relu(x @ params["enc_w"] + params["enc_b"])
    props_ref = latent_ref @ params["cls_w"] + params["cls_b"]
    ref = props_ref * params["scale"] + params["mean"]
    assert jnp.allclose(out, ref, atol=1e-5, rtol=1e-5), "fused kernel mismatch"

    # Standalone scaler kernel on a non-aligned shape: exercises the
    # cdiv-grid / boundary-masked path that replaced jnp.pad + slicing.
    x_odd = jax.random.normal(ks[7], (13, 200), dtype=jnp.float32)
    sc = jnp.linspace(0.5, 2.0, 200, dtype=jnp.float32)
    mu = jnp.linspace(-1.0, 1.0, 200, dtype=jnp.float32)
    out_odd = jax.block_until_ready(scaler_inverse_transform(x_odd, sc, mu))
    assert jnp.allclose(out_odd, x_odd * sc + mu, atol=1e-6, rtol=1e-6), \
        "standalone scaler mismatch"

    # Fused kernel with a forced multi-tile / masked-boundary M axis.
    x2 = jax.random.normal(ks[7], (20, 64), dtype=jnp.float32)
    w2 = jax.random.normal(ks[3], (64, 96), jnp.float32) * 0.1
    b2 = jax.random.normal(ks[4], (96,), jnp.float32) * 0.1
    s2 = jnp.linspace(0.5, 2.0, 96, dtype=jnp.float32)
    m2 = jnp.linspace(-1.0, 1.0, 96, dtype=jnp.float32)
    out2 = jax.block_until_ready(dense_with_scaler(x2, w2, b2, s2, m2, tile_m=8))
    ref2 = (x2 @ w2 + b2) * s2 + m2
    assert jnp.allclose(out2, ref2, atol=1e-5, rtol=1e-5), "boundary-tile mismatch"

    print("KERNEL_OK")
</pallas_src>

<mosaic_0001>
module attributes {stable_mosaic.version = 11 : i64} {
  func.func @_dense_scaler_kernel(%arg0: i32, %arg1: i32, %arg2: i32, %arg3: memref<16x64xf32, #tpu.memory_space<vmem>>, %arg4: memref<64x32xf32, #tpu.memory_space<vmem>>, %arg5: memref<1x32xf32, #tpu.memory_space<vmem>>, %arg6: memref<1x32xf32, #tpu.memory_space<vmem>>, %arg7: memref<1x32xf32, #tpu.memory_space<vmem>>, %arg8: memref<16x32xf32, #tpu.memory_space<vmem>>, %arg9: memref<16x32xf32, #tpu.memory_space<vmem>>) attributes {dimension_semantics = [#tpu.dimension_semantics<parallel>, #tpu.dimension_semantics<parallel>, #tpu.dimension_semantics<arbitrary>], iteration_bounds = array<i64: 1, 1, 1>, scalar_prefetch = 0 : i64, scratch_operands = 1 : i64, tpu.core_type = #tpu.core_type<tc>, window_params = [{transform_indices = @transform_0, window_bounds = array<i64: 16, 64>}, {transform_indices = @transform_1, window_bounds = array<i64: 64, 32>}, {transform_indices = @transform_2, window_bounds = array<i64: 1, 32>}, {transform_indices = @transform_3, window_bounds = array<i64: 1, 32>}, {transform_indices = @transform_4, window_bounds = array<i64: 1, 32>}, {transform_indices = @transform_5, window_bounds = array<i64: 16, 32>}]} {
    %c0_i32 = arith.constant 0 : i32
    %0 = arith.cmpi eq, %arg2, %c0_i32 : i32
    %1 = arith.extui %0 : i1 to i32
    %c0_i32_0 = arith.constant 0 : i32
    %2 = arith.cmpi ne, %1, %c0_i32_0 : i32
    scf.if %2 {
      %cst_10 = arith.constant 0.000000e+00 : f32
      %12 = vector.broadcast %cst_10 : f32 to vector<16x32xf32>
      %c0_11 = arith.constant 0 : index
      %c0_12 = arith.constant 0 : index
      %13 = vector.load %arg9[%c0_11, %c0_12] : memref<16x32xf32, #tpu.memory_space<vmem>>, vector<16x32xf32>
      tpu.vector_store %arg9[%c0_11, %c0_12], %12 {strides = array<i32>} : memref<16x32xf32, #tpu.memory_space<vmem>>, vector<16x32xf32>,
    } else {
    }
    %c0 = arith.constant 0 : index
    %c0_1 = arith.constant 0 : index
    %3 = vector.load %arg9[%c0, %c0_1] : memref<16x32xf32, #tpu.memory_space<vmem>>, vector<16x32xf32>
    %c0_2 = arith.constant 0 : index
    %c0_3 = arith.constant 0 : index
    %4 = vector.load %arg3[%c0_2, %c0_3] : memref<16x64xf32, #tpu.memory_space<vmem>>, vector<16x64xf32>
    %c0_4 = arith.constant 0 : index
    %c0_5 = arith.constant 0 : index
    %5 = vector.load %arg4[%c0_4, %c0_5] : memref<64x32xf32, #tpu.memory_space<vmem>>, vector<64x32xf32>
    %cst = arith.constant dense<0.000000e+00> : vector<16x32xf32>
    %6 = tpu.matmul %4, %5, %cst {dimension_numbers = #tpu.dot_dimension_numbers<[1], [0], [0], [1], [0, 0, 1, 1], [], []>} : vector<16x64xf32>, vector<64x32xf32>, vector<16x32xf32> -> vector<16x32xf32>
    %7 = arith.addf %3, %6 : vector<16x32xf32>
    %c0_6 = arith.constant 0 : index
    %c0_7 = arith.constant 0 : index
    %8 = vector.load %arg9[%c0_6, %c0_7] : memref<16x32xf32, #tpu.memory_space<vmem>>, vector<16x32xf32>
    tpu.vector_store %arg9[%c0_6, %c0_7], %7 {strides = array<i32>} : memref<16x32xf32, #tpu.memory_space<vmem>>, vector<16x32xf32>,
    %c0_i32_8 = arith.constant 0 : i32
    %9 = arith.cmpi eq, %arg2, %c0_i32_8 : i32
    %10 = arith.extui %9 : i1 to i32
    %c0_i32_9 = arith.constant 0 : i32
    %11 = arith.cmpi ne, %10, %c0_i32_9 : i32
    scf.if %11 {
      %c0_10 = arith.constant 0 : index
      %c0_11 = arith.constant 0 : index
      %12 = vector.load %arg9[%c0_10, %c0_11] : memref<16x32xf32, #tpu.memory_space<vmem>>, vector<16x32xf32>
      %c0_12 = arith.constant 0 : index
      %c0_13 = arith.constant 0 : index
      %13 = vector.load %arg5[%c0_12, %c0_13] : memref<1x32xf32, #tpu.memory_space<vmem>>, vector<1x32xf32>
      %14 = vector.broadcast %13 : vector<1x32xf32> to vector<16x32xf32>
      %15 = arith.addf %12, %14 : vector<16x32xf32>
      %c0_14 = arith.constant 0 : index
      %c0_15 = arith.constant 0 : index
      %16 = vector.load %arg6[%c0_14, %c0_15] : memref<1x32xf32, #tpu.memory_space<vmem>>, vector<1x32xf32>
      %17 = vector.broadcast %16 : vector<1x32xf32> to vector<16x32xf32>
      %18 = arith.mulf %15, %17 : vector<16x32xf32>
      %c0_16 = arith.constant 0 : index
      %c0_17 = arith.constant 0 : index
      %19 = vector.load %arg7[%c0_16, %c0_17] : memref<1x32xf32, #tpu.memory_space<vmem>>, vector<1x32xf32>
      %20 = vector.broadcast %19 : vector<1x32xf32> to vector<16x32xf32>
      %21 = arith.addf %18, %20 : vector<16x32xf32>
      %c0_18 = arith.constant 0 : index
      %c0_19 = arith.constant 0 : index
      %22 = vector.load %arg8[%c0_18, %c0_19] : memref<16x32xf32, #tpu.memory_space<vmem>>, vector<16x32xf32>
      tpu.vector_store %arg8[%c0_18, %c0_19], %21 {strides = array<i32>} : memref<16x32xf32, #tpu.memory_space<vmem>>, vector<16x32xf32>,
    } else {
    }
    return
  }
  func.func @transform_0(%arg0: i32, %arg1: i32, %arg2: i32) -> (i32, i32) {
    %c0_i32 = arith.constant 0 : i32
    return %arg0, %arg2 : i32, i32
  }
  func.func @transform_1(%arg0: i32, %arg1: i32, %arg2: i32) -> (i32, i32) {
    %c0_i32 = arith.constant 0 : i32
    return %arg2, %arg1 : i32, i32
  }
  func.func @transform_2(%arg0: i32, %arg1: i32, %arg2: i32) -> (i32, i32) {
    %c0_i32 = arith.constant 0 : i32
    %c0_i32_0 = arith.constant 0 : i32
    return %c0_i32, %arg1 : i32, i32
  }
  func.func @transform_3(%arg0: i32, %arg1: i32, %arg2: i32) -> (i32, i32) {
    %c0_i32 = arith.constant 0 : i32
    %c0_i32_0 = arith.constant 0 : i32
    return %c0_i32, %arg1 : i32, i32
  }
  func.func @transform_4(%arg0: i32, %arg1: i32, %arg2: i32) -> (i32, i32) {
    %c0_i32 = arith.constant 0 : i32
    %c0_i32_0 = arith.constant 0 : i32
    return %c0_i32, %arg1 : i32, i32
  }
  func.func @transform_5(%arg0: i32, %arg1: i32, %arg2: i32) -> (i32, i32) {
    %c0_i32 = arith.constant 0 : i32
    return %arg0, %arg1 : i32, i32
  }
}

</mosaic_0001>

<llo_original>
// kernel: tpu_custom_call.1
$region0: #{tpu_custom_call.1}
  #allocation0 [shape = 'u32[]', space=smem, size = 0x4, offset = 0x4, fixed_abs, tag = 'smem constant byte address 0x4 - core index']
  #allocation1 [shape = 'u32[144,128]{1,0:T(1,128)}', space=vmem, size = 0x12000, scoped, tag = 'internal scratch']
  #allocation2 [shape = 'f32[16,32]{1,0:T(8,128)}', space=vmem, size = 0x2000, scoped, tag = 'scratch operand']
  %s0 = inlined_call_operand.vmem [shape: f32[16,64], index: 0, kind: input, shape index: {}]
  %s1 = inlined_call_operand.vmem [shape: f32[64,32], index: 1, kind: input, shape index: {}]
  %s2 = inlined_call_operand.vmem [shape: f32[1,32], index: 2, kind: input, shape index: {}]
  %s3 = inlined_call_operand.vmem [shape: f32[1,32], index: 3, kind: input, shape index: {}]
  %s4 = inlined_call_operand.vmem [shape: f32[1,32], index: 4, kind: input, shape index: {}]
  %s5 = inlined_call_operand.hbm [shape: f32[16,32], index: 5, kind: output, shape index: {}]
  %s6 = sld [smem:[#allocation0]]
  $region38: #{tpu_custom_call.1} parent=0
    _
  %s8 = ssub.s32 1, %s6
  %s9 = scalar_select 0, %s8, %s6
  $region1: #{tpu_custom_call.1} parent=0
    #allocation3 [shape = 'u8[8192]{0}', space=vmem, size = 0x2000, scoped, tag = 'output window, operand 0, single buffered']
    #allocation4 [shape = 's32[1]{0}', space=sflag, size = 0x4, scoped, tag = 'scoped memory for tpu_custom_call.1']
    %10 = vsyncpa [#allocation4], 0
    // Predicated region
    $region2: #{tpu_custom_call.1} parent=1 // pred_check
      _
    $region3: #{tpu_custom_call.1} parent=1 // pred_check_branch
      %12 = sbr.rel (0) target = $region5
    $region4: #{tpu_custom_call.1} parent=1 // pred_region
      _
    $region5: #{tpu_custom_call.1} parent=1 // pred_fallthru
      _
    // Predicated region
    $region6: #{tpu_custom_call.1} parent=1 // pred_check
      _
    $region7: #{tpu_custom_call.1} parent=1 // pred_check_branch
      %14 = sbr.rel (0) target = $region9
    $region8: #{tpu_custom_call.1} parent=1 // pred_region
      _
    $region9: #{tpu_custom_call.1} parent=1 // pred_fallthru
      _
    // Predicated region
    $region10: #{tpu_custom_call.1} parent=1 // pred_check
      _
    $region11: #{tpu_custom_call.1} parent=1 // pred_check_branch
      %16 = sbr.rel (0) target = $region13
    $region12: #{tpu_custom_call.1} parent=1 // pred_region
      _
    $region13: #{tpu_custom_call.1} parent=1 // pred_fallthru
      _
    // Predicated region
    $region14: #{tpu_custom_call.1} parent=1 // pred_check
      _
    $region15: #{tpu_custom_call.1} parent=1 // pred_check_branch
      %18 = sbr.rel (0) target = $region17
    $region16: #{tpu_custom_call.1} parent=1 // pred_region
      _
    $region17: #{tpu_custom_call.1} parent=1 // pred_fallthru
      _
    // Predicated region
    $region18: #{tpu_custom_call.1} parent=1 // pred_check
      _
    $region19: #{tpu_custom_call.1} parent=1 // pred_check_branch
      %20 = sbr.rel (0) target = $region21
    $region20: #{tpu_custom_call.1} parent=1 // pred_region
      _
    $region21: #{tpu_custom_call.1} parent=1 // pred_fallthru
      _
    %p21 = scmp.eq.s32.totalorder 0, 0
    // Predicated region
    $region22: #{tpu_custom_call.1} parent=1 // pred_check
      %p22 = pneg %p21
    $region23: #{tpu_custom_call.1} parent=1 // pred_check_branch
      %24 = sbr.rel (%p22) target = $region25
    $region24: #{tpu_custom_call.1} parent=1 // pred_region
      %vm25 = vcmask 261120
      %26 = vst.msk [vmem:[#allocation2] sm:$0xff] %vm25, 0.0
      %27 = vst.msk [vmem:[#allocation2 + $0x8] sm:$0xff] %vm25, 0.0
    $region25: #{tpu_custom_call.1} parent=1 // pred_fallthru
      _
    %v28 = vld [vmem:[#allocation2] sm:$0xff]
    %v29 = vld [vmem:[#allocation2 + $0x8] sm:$0xff]
    %v30 = vld [vmem:[%s0] sm:$0xff]
    %v31 = vld [vmem:[%s0 + $0x8] sm:$0xff]
    %v32 = vld [vmem:[%s1] sm:$0xff]
    %v33 = vld [vmem:[%s1 + $0x8] sm:$0xff]
    %v34 = vld [vmem:[%s1 + $0x10] sm:$0xff]
    %v35 = vld [vmem:[%s1 + $0x18] sm:$0xff]
    %v36 = vld [vmem:[%s1 + $0x20] sm:$0xff]
    %v37 = vld [vmem:[%s1 + $0x28] sm:$0xff]
    %v38 = vld [vmem:[%s1 + $0x30] sm:$0xff]
    %v39 = vld [vmem:[%s1 + $0x38] sm:$0xff]
    %vm40 = vcmask 523264
    %v42 = vsel %vm40, %v30, 0
    %v45 = vsel %vm40, %v31, 0
    %47 = vmatprep.subr.mxu0 0.0
    %48 = vmatpush1.msra.mxu0 0.0
    %49 = vmatprep.subr.mxu0 0.0
    %50 = vmatpush1.msra.mxu0 0.0
    %51 = vmatprep.subr.mxu0 0.0
    %52 = vmatpush1.msra.mxu0 0.0
    %53 = vmatprep.subr.mxu0 0.0
    %54 = vmatpush1.msra.mxu0 0.0
    %55 = vmatprep.subr.mxu0 0.0
    %56 = vmatpush1.msra.mxu0 0.0
    %57 = vmatprep.subr.mxu0 0.0
    %58 = vmatpush1.msra.mxu0 0.0
    %59 = vmatprep.subr.mxu0 0.0
    %60 = vmatpush1.msra.mxu0 0.0
    %61 = vmatprep.subr.mxu0 0.0
    %62 = vmatpush1.msra.mxu0 0.0
    %63 = vmatprep.subr.mxu0 0.0
    %64 = vmatpush1.msra.mxu0 %v39
    %65 = vmatprep.subr.mxu0 0.0
    %66 = vmatpush1.msra.mxu0 %v38
    %67 = vmatprep.subr.mxu0 0.0
    %68 = vmatpush1.msra.mxu0 %v37
    %69 = vmatprep.subr.mxu0 0.0
    %70 = vmatpush1.msra.mxu0 %v36
    %71 = vmatprep.subr.mxu0 0.0
    %72 = vmatpush1.msra.mxu0 %v35
    %73 = vmatprep.subr.mxu0 0.0
    %74 = vmatpush1.msra.mxu0 %v34
    %75 = vmatprep.subr.mxu0 0.0
    %76 = vmatpush1.msra.mxu0 %v33
    %77 = vmatprep.subr.mxu0 0.0
    %78 = vmatpush1.msra.mxu0 %v32
    %79 = vmatprep.subr.mxu0 0.0
    %80 = vmatpush2.msra.mxu0 0.0
    %81 = vmatprep.subr.mxu0 0.0
    %82 = vmatpush2.msra.mxu0 0.0
    %83 = vmatprep.subr.mxu0 0.0
    %84 = vmatpush2.msra.mxu0 0.0
    %85 = vmatprep.subr.mxu0 0.0
    %86 = vmatpush2.msra.mxu0 0.0
    %87 = vmatprep.subr.mxu0 0.0
    %88 = vmatpush2.msra.mxu0 0.0
    %89 = vmatprep.subr.mxu0 0.0
    %90 = vmatpush2.msra.mxu0 0.0
    %91 = vmatprep.subr.mxu0 0.0
    %92 = vmatpush2.msra.mxu0 0.0
    %93 = vmatprep.subr.mxu0 0.0
    %94 = vmatpush2.msra.mxu0 0.0
    %95 = vmatprep.subr.mxu0 0.0
    %96 = vmatpush2.msra.mxu0 0.0
    %97 = vmatprep.subr.mxu0 0.0
    %98 = vmatpush2.msra.mxu0 0.0
    %99 = vmatprep.subr.mxu0 0.0
    %100 = vmatpush2.msra.mxu0 0.0
    %101 = vmatprep.subr.mxu0 0.0
    %102 = vmatpush2.msra.mxu0 0.0
    %103 = vmatprep.subr.mxu0 0.0
    %104 = vmatpush2.msra.mxu0 0.0
    %105 = vmatprep.subr.mxu0 0.0
    %106 = vmatpush2.msra.mxu0 0.0
    %107 = vmatprep.subr.mxu0 0.0
    %108 = vmatpush2.msra.mxu0 0.0
    %109 = vmatprep.subr.mxu0 0.0
    %110 = vmatpush2.msra.mxu0 0.0
    %111 = vmatprep.mubr.f32.mxu0 0.0
    %112 = vmatmul.mubr.f32.gmra.mxu0 %v42
    %v113 = vpop.f32.mrf.mxu0
    %v114 = vadd.f32 0.0, %v113
    %v115 = vpop.f32.mrf.mxu0
    %116 = vmatprep.mubr.f32.mxu0 0.0
    %117 = vmatmul.mubr.f32.gmra.mxu0 %v45
    %v118 = vpop.f32.mrf.mxu0
    %v119 = vadd.f32 0.0, %v118
    %v120 = vpop.f32.mrf.mxu0
    %121 = vdwg.mxu0
    %v122 = vadd.f32 %v28, %v114
    %v123 = vadd.f32 %v29, %v119
    %vm124 = vcmask 261120
    %125 = vst.msk [vmem:[#allocation2] sm:$0xff] %vm124, %v122
    %126 = vst.msk [vmem:[#allocation2 + $0x8] sm:$0xff] %vm124, %v123
    // Predicated region
    $region26: #{tpu_custom_call.1} parent=1 // pred_check
      %p127 = pneg %p21
    $region27: #{tpu_custom_call.1} parent=1 // pred_check_branch
      %129 = sbr.rel (%p127) target = $region29
    $region28: #{tpu_custom_call.1} parent=1 // pred_region
      %v130 = vld [vmem:[#allocation2] sm:$0xff]
      %v131 = vld [vmem:[#allocation2 + $0x8] sm:$0xff]
      %v132 = vld [vmem:[%s2] sm:$0x1]
      %v134 = vlaneseq
      %v135 = vshrl.u32 %v134, 7
      %v136 = vsub.s32 0, %v135
      %v137 = vrot.slane %v132, %v136
      %v139 = vadd.f32 %v130, %v137
      %v140 = vadd.f32 %v131, %v137
      %v141 = vld [vmem:[%s3] sm:$0x1]
      %v143 = vlaneseq
      %v144 = vshrl.u32 %v143, 7
      %v145 = vsub.s32 0, %v144
      %v146 = vrot.slane %v141, %v145
      %v148 = vmul.f32 %v139, %v146
      %v149 = vmul.f32 %v140, %v146
      %v150 = vld [vmem:[%s4] sm:$0x1]
      %v152 = vlaneseq
      %v153 = vshrl.u32 %v152, 7
      %v154 = vsub.s32 0, %v153
      %v155 = vrot.slane %v150, %v154
      %v157 = vadd.f32 %v148, %v155
      %v158 = vadd.f32 %v149, %v155
      %159 = vst.msk [vmem:[#allocation3] sm:$0xff] %vm124, %v157
      %160 = vst.msk [vmem:[#allocation3 + $0x8] sm:$0xff] %vm124, %v158
    $region29: #{tpu_custom_call.1} parent=1 // pred_fallthru
      _
    // Predicated region
    $region30: #{tpu_custom_call.1} parent=1 // pred_check
      _
    $region31: #{tpu_custom_call.1} parent=1 // pred_check_branch
      %162 = sbr.rel (0) target = $region33
    $region32: #{tpu_custom_call.1} parent=1 // pred_region
      %s164 = ssub.s32 256, 256
      %165 = vsyncadd [#allocation4], %s164
      %s166 = sshll.u32 [#allocation3], 4
      %s167 = int_to_ptr.vmem [resolvable:$true] %s166
      %172 = dma.vmem_to_hbm [thread:$0]  %s167, 256, %s5, [#allocation4], 128, 128, 8
    $region33: #{tpu_custom_call.1} parent=1 // pred_fallthru
      _
    // Predicated region
    $region34: #{tpu_custom_call.1} parent=1 // pred_check
      _
    $region35: #{tpu_custom_call.1} parent=1 // pred_check_branch
      %174 = sbr.rel (0) target = $region37
    $region36: #{tpu_custom_call.1} parent=1 // pred_region
      %175 = dma.done [#allocation4], 256
    $region37: #{tpu_custom_call.1} parent=1 // pred_fallthru
      _
    %176 = vsyncpa [#allocation4], 1

</llo_original>
